<compile_context>
chip_gen: v7x
topology: tpu7x:2x2x1
jax: 0.10.0
libtpu: 0.0.40
codegen_flags: <defaults>
</compile_context>

<pallas_src>
import functools

import jax
import jax.numpy as jnp
import numpy as np
from jax.experimental import pallas as pl
from jax.experimental.pallas import tpu as pltpu

BN_EPS = 1e-5
LANES = 128


def _ru(x, m):
    return ((x + m - 1) // m) * m


# ---------------------------------------------------------------------------
# Kernels
# ---------------------------------------------------------------------------

def _conv_stats_kernel(*refs, s_valid, tile_s, emit_y):
    """Phase 1 (BN path): channel-major conv GEMM + per-tile centered stats.

    refs = (w_ref, p_ref [, y_ref], sum_ref, m2_ref)
      w_ref : (Cout_pad, K)          bf16
      p_ref : (1, K, tile_s)         bf16 (zero-padded spatial columns)
      y_ref : (1, Cout_pad, tile_s)  bf16   [only when emit_y]
      sum_ref / m2_ref : (1, 1, Cout_pad, 1) f32
    """
    if emit_y:
        w_ref, p_ref, y_ref, sum_ref, m2_ref = refs
    else:
        w_ref, p_ref, sum_ref, m2_ref = refs

    p = p_ref[...][0]                                       # (K, tile_s)
    y = jnp.dot(w_ref[...], p, preferred_element_type=jnp.float32)
    if emit_y:
        y_ref[...] = y.astype(y_ref.dtype)[None]

    # Per-tile centered statistics; the stable Chan combine happens on host.
    col = (jax.lax.broadcasted_iota(jnp.int32, (1, tile_s), 1)
           + pl.program_id(1) * tile_s)
    mask = (col < s_valid).astype(jnp.float32)              # (1, tile_s)
    cnt = jnp.minimum(tile_s, s_valid - pl.program_id(1) * tile_s)
    cnt = jnp.maximum(cnt, 1).astype(jnp.float32)
    s_col = jnp.sum(y, axis=1, keepdims=True)               # padded cols are 0
    mean_t = s_col / cnt
    d = (y - mean_t) * mask
    m2_col = jnp.sum(d * d, axis=1, keepdims=True)
    sum_ref[...] = s_col[None, None]
    m2_ref[...] = m2_col[None, None]


def _apply_kernel(*refs, cout, has_relu, recompute):
    """Phase 2: y * scale + shift (+ReLU), stored channel-major (== NCHW).

    recompute=True : refs = (w_ref, p_ref, scale_ref, shift_ref, o_ref)
                     (GEMM recomputed; also used for the no-BN single pass
                      with scale = 1 and shift = conv bias).
    recompute=False: refs = (y_ref, scale_ref, shift_ref, o_ref)
                     (reads the bf16 intermediate written by phase 1).
    """
    if recompute:
        w_ref, p_ref, scale_ref, shift_ref, o_ref = refs
        y = jnp.dot(w_ref[...], p_ref[...][0],
                    preferred_element_type=jnp.float32)     # (Cout_pad, tile_s)
    else:
        y_ref, scale_ref, shift_ref, o_ref = refs
        y = y_ref[...][0].astype(jnp.float32)
    y = y * scale_ref[...] + shift_ref[...]
    if has_relu:
        y = jnp.maximum(y, 0.0)
    o_ref[...] = y[:cout].astype(o_ref.dtype)[None]


# ---------------------------------------------------------------------------
# Host-side glue
# ---------------------------------------------------------------------------

def _im2col_nchw_kmajor(x, kh, kw, stride, pad):
    """NCHW -> K-major patches (N, KH*KW*Cin, OH*OW), feature order (ky,kx,ci)."""
    n, c, h, w = x.shape
    xp = jnp.pad(x, ((0, 0), (0, 0), (pad, pad), (pad, pad)))
    oh = (h + 2 * pad - kh) // stride + 1
    ow = (w + 2 * pad - kw) // stride + 1
    slabs = []
    for ky in range(kh):
        for kx in range(kw):
            slabs.append(xp[:, :, ky:ky + (oh - 1) * stride + 1:stride,
                               kx:kx + (ow - 1) * stride + 1:stride])
    p = jnp.stack(slabs, axis=1)                            # (N, KH*KW, C, OH, OW)
    return p.reshape(n, kh * kw * c, oh * ow), oh, ow


def _vmem_budget_bytes():
    try:
        cap = int(pltpu.get_tpu_info().vmem_capacity_bytes)
    except Exception:
        cap = 64 << 20
    return (cap * 3) // 4          # leave 25% headroom (v7x: 48 MiB, v6e: 96 MiB)


def conv_bn_relu_forward(x_nchw, conv_w, conv_b, bn_gamma, bn_beta, *,
                         stride=1, padding=1, has_bn=True, has_relu=True,
                         tile_s=1024, mxu_dtype=jnp.bfloat16, recompute=None):
    """Forward pass matching the PyTorch conv_bn_relu module (groups=1).

    x_nchw : (N, Cin, H, W)        conv_w : (Cout, Cin, KH, KW)
    conv_b : (Cout,)               bn_gamma / bn_beta : (Cout,)
    Returns (N, Cout, OH, OW) float32.
    """
    n, cin, h, w = x_nchw.shape
    cout, cin_w, kh, kw = conv_w.shape
    assert cin == cin_w, "groups != 1 not supported"   # TODO(synk): groups

    patches, oh, ow = _im2col_nchw_kmajor(x_nchw, kh, kw, stride, padding)
    k = kh * kw * cin
    s_valid = oh * ow
    cout_pad = _ru(max(cout, 1), LANES)

    if recompute is None:
        # Recompute the GEMM in phase 2 when re-reading the patches is cheaper
        # than streaming a bf16 intermediate through HBM (small K).
        recompute = k <= 1024

    in_bytes = jnp.dtype(mxu_dtype).itemsize

    # ---- spatial tile: lane-aligned, sized to the VMEM budget ---------------
    budget = _vmem_budget_bytes()

    def vmem_est(ts_):
        w_b = cout_pad * _ru(k, LANES) * in_bytes * 2        # weights, x2 buffers
        p_b = _ru(k, 16) * ts_ * in_bytes * 2                # patch tile, x2
        y_b = cout_pad * ts_ * 2 * 2                         # bf16 intermediate
        o_b = _ru(cout, 8) * ts_ * 4 * 2                     # f32 output tile
        tmp = cout_pad * ts_ * 4 * 3                         # f32 in-kernel temps
        return w_b + p_b + max(y_b, o_b) + tmp + 64 * cout_pad * 4

    ts = min(_ru(max(int(tile_s), LANES), LANES), _ru(s_valid, LANES))
    while vmem_est(ts) > budget and ts > LANES:
        ts = max(LANES, (ts // 2 // LANES) * LANES)
    # Balance tile sizes so the last tile is not mostly padding.
    num_t = -(-s_valid // ts)
    ts = min(ts, _ru(-(-s_valid // num_t), LANES))
    num_t = -(-s_valid // ts)
    s_pad = num_t * ts

    patches = jnp.pad(patches, ((0, 0), (0, 0), (0, s_pad - s_valid)))
    patches = patches.astype(mxu_dtype)
    w_t = jnp.transpose(conv_w, (0, 2, 3, 1)).reshape(cout, k)   # (ky,kx,ci) order
    w_t = jnp.pad(w_t, ((0, cout_pad - cout), (0, 0))).astype(mxu_dtype)

    cparams = pltpu.CompilerParams(
        dimension_semantics=("parallel", "parallel"),
        vmem_limit_bytes=int(budget))

    w_spec = pl.BlockSpec((cout_pad, k), lambda nn, ss: (0, 0))
    p_spec = pl.BlockSpec((1, k, ts), lambda nn, ss: (nn, 0, ss))
    col_spec = pl.BlockSpec((cout_pad, 1), lambda nn, ss: (0, 0))
    y_spec = pl.BlockSpec((1, cout_pad, ts), lambda nn, ss: (nn, 0, ss))
    o_spec = pl.BlockSpec((1, cout, ts), lambda nn, ss: (nn, 0, ss))
    stat_spec = pl.BlockSpec((1, 1, cout_pad, 1), lambda nn, ss: (nn, ss, 0, 0))
    grid = (n, num_t)

    if has_bn:
        # ---- Phase 1: conv GEMM + per-tile centered BN statistics ----------
        kernel1 = functools.partial(_conv_stats_kernel, s_valid=s_valid,
                                    tile_s=ts, emit_y=not recompute)
        out_shapes, out_specs = [], []
        if not recompute:
            out_shapes.append(
                jax.ShapeDtypeStruct((n, cout_pad, s_pad), jnp.bfloat16))
            out_specs.append(y_spec)
        out_shapes += [jax.ShapeDtypeStruct((n, num_t, cout_pad, 1), jnp.float32),
                       jax.ShapeDtypeStruct((n, num_t, cout_pad, 1), jnp.float32)]
        out_specs += [stat_spec, stat_spec]

        phase1 = pl.pallas_call(
            kernel1,
            out_shape=tuple(out_shapes),
            grid_spec=pltpu.PrefetchScalarGridSpec(
                num_scalar_prefetch=0, grid=grid,
                in_specs=[w_spec, p_spec],
                out_specs=tuple(out_specs)),
            compiler_params=cparams,
        )(w_t, patches)
        if recompute:
            sums, m2s = phase1
            y_bf16 = None
        else:
            y_bf16, sums, m2s = phase1

        # ---- Chan combine of per-tile (count, sum, M2) -> scale / shift ----
        counts = jnp.asarray(
            np.minimum(ts, s_valid - np.arange(num_t) * ts).astype(np.float32))
        sums = sums.reshape(n, num_t, cout_pad)
        m2s = m2s.reshape(n, num_t, cout_pad)
        total = float(n * s_valid)
        mean = jnp.sum(sums, axis=(0, 1)) / total                  # (cout_pad,)
        tile_mean = sums / counts[None, :, None]
        m2 = (jnp.sum(m2s, axis=(0, 1))
              + jnp.sum(counts[None, :, None] * (tile_mean - mean) ** 2,
                        axis=(0, 1)))
        var = jnp.maximum(m2 / total, 0.0)                         # biased, as BN

        g = jnp.pad(bn_gamma.astype(jnp.float32), (0, cout_pad - cout))
        b = jnp.pad(bn_beta.astype(jnp.float32), (0, cout_pad - cout))
        scale = g * jax.lax.rsqrt(var + BN_EPS)
        shift = b - mean * scale        # conv bias cancels exactly under BN
    else:
        y_bf16 = None
        recompute = True                # single pass: conv + bias (+ ReLU)
        scale = jnp.ones((cout_pad,), jnp.float32)
        shift = jnp.pad(conv_b.astype(jnp.float32), (0, cout_pad - cout))

    scale = scale.reshape(cout_pad, 1)
    shift = shift.reshape(cout_pad, 1)

    # ---- Phase 2: (recompute GEMM | read bf16 y) -> scale/shift/ReLU,
    #               stored channel-major == NCHW (no trailing transpose) ------
    kernel2 = functools.partial(_apply_kernel, cout=cout, has_relu=has_relu,
                                recompute=recompute)
    if recompute:
        in_ops = (w_t, patches, scale, shift)
        in_specs = [w_spec, p_spec, col_spec, col_spec]
    else:
        in_ops = (y_bf16, scale, shift)
        in_specs = [y_spec, col_spec, col_spec]

    out = pl.pallas_call(
        kernel2,
        out_shape=jax.ShapeDtypeStruct((n, cout, s_pad), jnp.float32),
        grid_spec=pltpu.PrefetchScalarGridSpec(
            num_scalar_prefetch=0, grid=grid,
            in_specs=in_specs, out_specs=o_spec),
        compiler_params=cparams,
    )(*in_ops)

    if s_pad != s_valid:
        out = out[:, :, :s_valid]
    return out.reshape(n, cout, oh, ow)


# ---------------------------------------------------------------------------
# Pure-JAX reference (f32 conv + train-mode BatchNorm + ReLU)
# ---------------------------------------------------------------------------

def _reference_forward(x, w, b, gamma, beta, *, stride, padding,
                       has_bn, has_relu):
    y = jax.lax.conv_general_dilated(
        x, w, window_strides=(stride, stride),
        padding=[(padding, padding), (padding, padding)],
        dimension_numbers=("NCHW", "OIHW", "NCHW"))
    y = y + b.reshape(1, -1, 1, 1)
    if has_bn:
        mean = jnp.mean(y, axis=(0, 2, 3), keepdims=True)
        var = jnp.mean((y - mean) ** 2, axis=(0, 2, 3), keepdims=True)
        y = (y - mean) * jax.lax.rsqrt(var + BN_EPS)
        y = y * gamma.reshape(1, -1, 1, 1) + beta.reshape(1, -1, 1, 1)
    if has_relu:
        y = jnp.maximum(y, 0.0)
    return y


if __name__ == "__main__":
    def _run_case(key, n, cin, hh, ww, cout, ksz, stride, padding,
                  has_bn, has_relu, tol, **kw):
        kx, kw_, kb, kg, kbe = jax.random.split(key, 5)
        x = jax.random.normal(kx, (n, cin, hh, ww), dtype=jnp.float32)
        w = jax.random.normal(kw_, (cout, cin, ksz, ksz), jnp.float32) * 0.1
        b = jax.random.normal(kb, (cout,), jnp.float32) * 0.1
        g = 1.0 + 0.1 * jax.random.normal(kg, (cout,), jnp.float32)
        be = 0.1 * jax.random.normal(kbe, (cout,), jnp.float32)
        out = conv_bn_relu_forward(x, w, b, g, be, stride=stride,
                                   padding=padding, has_bn=has_bn,
                                   has_relu=has_relu, **kw)
        out = jax.block_until_ready(out)
        ref = _reference_forward(x, w, b, g, be, stride=stride,
                                 padding=padding, has_bn=has_bn,
                                 has_relu=has_relu)
        assert out.shape == ref.shape, (out.shape, ref.shape)
        err = float(jnp.max(jnp.abs(out - ref)))
        assert err < tol, f"max abs error vs reference too large: {err}"

    root = jax.random.PRNGKey(0)
    k1, k2, k3, k4 = jax.random.split(root, 4)

    # Module config: conv_bn_relu(in_planes=4, out_planes=8, kernel_size=3,
    #                             stride=1, padding=1, has_bn=True, has_relu=True)
    _run_case(k1, 2, 4, 16, 16, 8, 3, 1, 1, True, True, 0.15)        # recompute path
    _run_case(k2, 2, 4, 16, 16, 8, 3, 1, 1, True, True, 0.15,
              recompute=False)                                       # bf16-intermediate path
    _run_case(k3, 2, 4, 16, 16, 8, 3, 1, 1, False, True, 0.08)       # conv + bias + ReLU
    _run_case(k4, 1, 3, 11, 11, 5, 3, 2, 1, True, True, 0.2)         # ragged spatial, stride 2

    print("KERNEL_OK")
</pallas_src>

<mosaic_0001>
module attributes {stable_mosaic.version = 11 : i64} {
  func.func @_conv_stats_kernel(%arg0: i32, %arg1: i32, %arg2: memref<128x36xbf16, #tpu.memory_space<vmem>>, %arg3: memref<1x36x256xbf16, #tpu.memory_space<vmem>>, %arg4: memref<1x1x128x1xf32, #tpu.memory_space<vmem>>, %arg5: memref<1x1x128x1xf32, #tpu.memory_space<vmem>>) attributes {dimension_semantics = [#tpu.dimension_semantics<parallel>, #tpu.dimension_semantics<parallel>], iteration_bounds = array<i64: 2, 1>, scalar_prefetch = 0 : i64, scratch_operands = 0 : i64, tpu.core_type = #tpu.core_type<tc>, window_params = [{pipeline_mode = #tpu.pipeline_mode<synchronous>, transform_indices = @transform_0, window_bounds = array<i64: 128, 36>}, {transform_indices = @transform_1, window_bounds = array<i64: 1, 36, 256>}, {transform_indices = @transform_2, window_bounds = array<i64: 1, 1, 128, 1>}, {transform_indices = @transform_3, window_bounds = array<i64: 1, 1, 128, 1>}]} {
    %c0 = arith.constant 0 : index
    %c0_0 = arith.constant 0 : index
    %c0_1 = arith.constant 0 : index
    %0 = vector.load %arg3[%c0, %c0_0, %c0_1] : memref<1x36x256xbf16, #tpu.memory_space<vmem>>, vector<1x36x256xbf16>
    %1 = vector.shape_cast %0 : vector<1x36x256xbf16> to vector<36x256xbf16>
    %c0_2 = arith.constant 0 : index
    %c0_3 = arith.constant 0 : index
    %2 = vector.load %arg2[%c0_2, %c0_3] : memref<128x36xbf16, #tpu.memory_space<vmem>>, vector<128x36xbf16>
    %cst = arith.constant dense<0.000000e+00> : vector<128x256xf32>
    %3 = tpu.matmul %2, %1, %cst {dimension_numbers = #tpu.dot_dimension_numbers<[1], [0], [0], [1], [0, 0, 1, 1], [], []>} : vector<128x36xbf16>, vector<36x256xbf16>, vector<128x256xf32> -> vector<128x256xf32>
    %4 = tpu.iota {dimensions = array<i32: 1>} : vector<1x256xi32>
    %c256_i32 = arith.constant 256 : i32
    %5 = arith.muli %arg1, %c256_i32 : i32
    %6 = vector.broadcast %5 : i32 to vector<1x256xi32>
    %7 = arith.addi %4, %6 : vector<1x256xi32>
    %c256_i32_4 = arith.constant 256 : i32
    %8 = vector.broadcast %c256_i32_4 : i32 to vector<1x256xi32>
    %9 = arith.cmpi slt, %7, %8 : vector<1x256xi32>
    %10 = arith.extui %9 : vector<1x256xi1> to vector<1x256xi32>
    %11 = arith.sitofp %10 : vector<1x256xi32> to vector<1x256xf32>
    %c256_i32_5 = arith.constant 256 : i32
    %12 = arith.muli %arg1, %c256_i32_5 : i32
    %c256_i32_6 = arith.constant 256 : i32
    %13 = arith.subi %c256_i32_6, %12 : i32
    %c256_i32_7 = arith.constant 256 : i32
    %14 = arith.minsi %c256_i32_7, %13 : i32
    %c1_i32 = arith.constant 1 : i32
    %15 = arith.maxsi %14, %c1_i32 : i32
    %16 = arith.sitofp %15 : i32 to f32
    %cst_8 = arith.constant dense<0.000000e+00> : vector<128xf32>
    %17 = vector.multi_reduction <add>, %3, %cst_8 [1] : vector<128x256xf32> to vector<128xf32>
    %18 = vector.shape_cast %17 : vector<128xf32> to vector<128x1xf32>
    %19 = vector.broadcast %16 : f32 to vector<128x1xf32>
    %20 = arith.divf %18, %19 : vector<128x1xf32>
    %21 = vector.broadcast %20 : vector<128x1xf32> to vector<128x256xf32>
    %22 = arith.subf %3, %21 : vector<128x256xf32>
    %23 = vector.broadcast %11 : vector<1x256xf32> to vector<128x256xf32>
    %24 = arith.mulf %22, %23 : vector<128x256xf32>
    %25 = arith.mulf %24, %24 : vector<128x256xf32>
    %cst_9 = arith.constant dense<0.000000e+00> : vector<128xf32>
    %26 = vector.multi_reduction <add>, %25, %cst_9 [1] : vector<128x256xf32> to vector<128xf32>
    %27 = vector.shape_cast %26 : vector<128xf32> to vector<128x1xf32>
    %28 = vector.shape_cast %18 : vector<128x1xf32> to vector<1x1x128x1xf32>
    %c0_10 = arith.constant 0 : index
    %c0_11 = arith.constant 0 : index
    %c0_12 = arith.constant 0 : index
    %c0_13 = arith.constant 0 : index
    %29 = vector.load %arg4[%c0_10, %c0_11, %c0_12, %c0_13] : memref<1x1x128x1xf32, #tpu.memory_space<vmem>>, vector<1x1x128x1xf32>
    tpu.vector_store %arg4[%c0_10, %c0_11, %c0_12, %c0_13], %28 {strides = array<i32>} : memref<1x1x128x1xf32, #tpu.memory_space<vmem>>, vector<1x1x128x1xf32>,
    %30 = vector.shape_cast %27 : vector<128x1xf32> to vector<1x1x128x1xf32>
    %c0_14 = arith.constant 0 : index
    %c0_15 = arith.constant 0 : index
    %c0_16 = arith.constant 0 : index
    %c0_17 = arith.constant 0 : index
    %31 = vector.load %arg5[%c0_14, %c0_15, %c0_16, %c0_17] : memref<1x1x128x1xf32, #tpu.memory_space<vmem>>, vector<1x1x128x1xf32>
    tpu.vector_store %arg5[%c0_14, %c0_15, %c0_16, %c0_17], %30 {strides = array<i32>} : memref<1x1x128x1xf32, #tpu.memory_space<vmem>>, vector<1x1x128x1xf32>,
    return
  }
  func.func @transform_0(%arg0: i32, %arg1: i32) -> (i32, i32) {
    %c0_i32 = arith.constant 0 : i32
    %c0_i32_0 = arith.constant 0 : i32
    %c0_i32_1 = arith.constant 0 : i32
    return %c0_i32, %c0_i32_0 : i32, i32
  }
  func.func @transform_1(%arg0: i32, %arg1: i32) -> (i32, i32, i32) {
    %c0_i32 = arith.constant 0 : i32
    %c0_i32_0 = arith.constant 0 : i32
    return %arg0, %c0_i32, %arg1 : i32, i32, i32
  }
  func.func @transform_2(%arg0: i32, %arg1: i32) -> (i32, i32, i32, i32) {
    %c0_i32 = arith.constant 0 : i32
    %c0_i32_0 = arith.constant 0 : i32
    %c0_i32_1 = arith.constant 0 : i32
    return %arg0, %arg1, %c0_i32, %c0_i32_0 : i32, i32, i32, i32
  }
  func.func @transform_3(%arg0: i32, %arg1: i32) -> (i32, i32, i32, i32) {
    %c0_i32 = arith.constant 0 : i32
    %c0_i32_0 = arith.constant 0 : i32
    %c0_i32_1 = arith.constant 0 : i32
    return %arg0, %arg1, %c0_i32, %c0_i32_0 : i32, i32, i32, i32
  }
}

</mosaic_0001>

<llo_original>
// kernel: tpu_custom_call.1
$region0: #{tpu_custom_call.1}
  #allocation0 [shape = 'u32[]', space=smem, size = 0x4, offset = 0x4, fixed_abs, tag = 'smem constant byte address 0x4 - core index']
  #allocation1 [shape = 'u32[144,128]{1,0:T(1,128)}', space=vmem, size = 0x12000, scoped, tag = 'internal scratch']
  %s0 = inlined_call_operand.vmem [shape: bf16[128,36], index: 0, kind: input, shape index: {}]
  %s1 = inlined_call_operand.vmem [shape: bf16[2,36,256], index: 1, kind: input, shape index: {}]
  %s2 = inlined_call_operand.vmem [shape: f32[2,1,128,1], index: 2, kind: output, shape index: {0}]
  %s3 = inlined_call_operand.vmem [shape: f32[2,1,128,1], index: 3, kind: output, shape index: {1}]
  %4 = xla_tuple %s2, %s3
  %s5 = sld [smem:[#allocation0]]
  $region49: #{tpu_custom_call.1} parent=0
    _
  %s7 = ssub.s32 1, %s5
  %s8 = scalar_select 0, %s7, %s5
  loop: start=0, step=1, limit=4
  $region2: #{tpu_custom_call.1} parent=0 // loop_pre_header
    _
  $region3: #{tpu_custom_call.1} parent=0 // loop_header
    %s10 = sphi 0, %s14
    %p11 = scmp.ge.s32.totalorder %s10, 4
    %s17 = sphi 0, %s29
    %s18 = sphi 0, %s25
    %s19 = sphi 0, %s17
    %s20 = sphi 0, %s18
    %s21 = sphi 0, %s19
    %s22 = sphi 0, %s20
    %s30 = sphi 0, %s30
    %s32 = sphi 0, %s30
    %s33 = sphi 0, %s32
    %s47 = sphi 0, %s33
    %s55 = sphi 0, %s57
    %s58 = sphi 0, %s55
    %s59 = sphi 0, %s58
    %s75 = sphi 0, %s59
    %s83 = sphi 0, %s85
    %s86 = sphi 0, %s83
    %s87 = sphi 0, %s86
    %s103 = sphi 0, %s87
    %s111 = sphi 0, %s113
    %s114 = sphi 0, %s111
    %s115 = sphi 0, %s114
    %s131 = sphi 0, %s115
  $region4: #{tpu_custom_call.1} parent=0 // loop_header_branch
    %13 = sbr.rel (%p11) target = $region8
  $region5: #{tpu_custom_call.1} parent=0 // loop_body
    %s15 = ssub.s32 %s10, 1
    %s16 = ssub.s32 %s10, 2
    %s23 = sadd.s32 1, %s18
    %p24 = scmp.ge.s32.totalorder %s23, 1
    %s25 = scalar_select %p24, 0, %s23
    %s26 = sadd.s32 1, %s17
    %s27 = scalar_select %p24, %s26, %s17
    %p28 = scmp.ge.s32.totalorder %s27, 2
    %s29 = scalar_select %p28, 0, %s27
    %s31 = sadd.s32 %s30, 1
    %p34 = scmp.eq.s32.totalorder %s10, 1
    %p35 = scmp.ne.s32.totalorder %s30, %s32
    %p36 = scmp.eq.s32.totalorder %s10, 0
    %p37 = por %p35, %p36
    %p38 = scmp.ne.s32.totalorder %s30, %s32
    %p39 = scmp.eq.s32.totalorder %s15, 1
    %p40 = por %p38, %p39
    %p41 = scmp.ne.s32.totalorder %s32, %s33
    %p42 = scmp.eq.s32.totalorder %s15, 0
    %p43 = por %p41, %p42
    %p44 = scmp.ne.s32.totalorder %s32, %s33
    %p45 = scmp.eq.s32.totalorder %s16, 1
    %p46 = por %p44, %p45
    %p48 = scmp.ne.s32.totalorder %s33, %s47
    %p49 = scmp.eq.s32.totalorder %s16, 0
    %p50 = por %p48, %p49
    %s51 = ssub.s32 %s17, %s29
    %s52 = ssub.s32 %s18, %s25
    %s53 = sor.u32 %s51, %s52
    %p54 = scmp.eq.s32.totalorder %s53, 0
    %s56 = sadd.s32 %s55, 1
    %s57 = scalar_select %p54, %s55, %s56
    %p60 = pneg %p54
    %p61 = scmp.eq.s32.totalorder %s10, 1
    %p62 = por %p60, %p61
    %p63 = scmp.ne.s32.totalorder %s55, %s58
    %p64 = scmp.eq.s32.totalorder %s10, 0
    %p65 = por %p63, %p64
    %p66 = scmp.ne.s32.totalorder %s55, %s58
    %p67 = scmp.eq.s32.totalorder %s15, 1
    %p68 = por %p66, %p67
    %p69 = scmp.ne.s32.totalorder %s58, %s59
    %p70 = scmp.eq.s32.totalorder %s15, 0
    %p71 = por %p69, %p70
    %p72 = scmp.ne.s32.totalorder %s58, %s59
    %p73 = scmp.eq.s32.totalorder %s16, 1
    %p74 = por %p72, %p73
    %p76 = scmp.ne.s32.totalorder %s59, %s75
    %p77 = scmp.eq.s32.totalorder %s16, 0
    %p78 = por %p76, %p77
    %s79 = ssub.s32 %s17, %s29
    %s80 = ssub.s32 %s18, %s25
    %s81 = sor.u32 %s79, %s80
    %p82 = scmp.eq.s32.totalorder %s81, 0
    %s84 = sadd.s32 %s83, 1
    %s85 = scalar_select %p82, %s83, %s84
    %p88 = pneg %p82
    %p89 = scmp.eq.s32.totalorder %s10, 1
    %p90 = por %p88, %p89
    %p91 = scmp.ne.s32.totalorder %s83, %s86
    %p92 = scmp.eq.s32.totalorder %s10, 0
    %p93 = por %p91, %p92
    %p94 = scmp.ne.s32.totalorder %s83, %s86
    %p95 = scmp.eq.s32.totalorder %s15, 1
    %p96 = por %p94, %p95
    %p97 = scmp.ne.s32.totalorder %s86, %s87
    %p98 = scmp.eq.s32.totalorder %s15, 0
    %p99 = por %p97, %p98
    %p100 = scmp.ne.s32.totalorder %s86, %s87
    %p101 = scmp.eq.s32.totalorder %s16, 1
    %p102 = por %p100, %p101
    %p104 = scmp.ne.s32.totalorder %s87, %s103
    %p105 = scmp.eq.s32.totalorder %s16, 0
    %p106 = por %p104, %p105
    %s107 = ssub.s32 %s17, %s29
    %s108 = ssub.s32 %s18, %s25
    %s109 = sor.u32 %s107, %s108
    %p110 = scmp.eq.s32.totalorder %s109, 0
    %s112 = sadd.s32 %s111, 1
    %s113 = scalar_select %p110, %s111, %s112
    %p116 = pneg %p110
    %p117 = scmp.eq.s32.totalorder %s10, 1
    %p118 = por %p116, %p117
    %p119 = scmp.ne.s32.totalorder %s111, %s114
    %p120 = scmp.eq.s32.totalorder %s10, 0
    %p121 = por %p119, %p120
    %p122 = scmp.ne.s32.totalorder %s111, %s114
    %p123 = scmp.eq.s32.totalorder %s15, 1
    %p124 = por %p122, %p123
    %p125 = scmp.ne.s32.totalorder %s114, %s115
    %p126 = scmp.eq.s32.totalorder %s15, 0
    %p127 = por %p125, %p126
    %p128 = scmp.ne.s32.totalorder %s114, %s115
    %p129 = scmp.eq.s32.totalorder %s16, 1
    %p130 = por %p128, %p129
    %p132 = scmp.ne.s32.totalorder %s115, %s131
    %p133 = scmp.eq.s32.totalorder %s16, 0
    %p134 = por %p132, %p133
    %p135 = scmp.le.s32.totalorder 1, %s10
    %p136 = scmp.lt.s32.totalorder %s10, 3
    %p137 = pnand %p135, %p136
    %p138 = pneg %p137
    // Predicated region
    $region9: #{tpu_custom_call.1} parent=5 // pred_check
      _
    $region10: #{tpu_custom_call.1} parent=5 // pred_check_branch
      %140 = sbr.rel (%p137) target = $region12
    $region11: #{tpu_custom_call.1} parent=5 // pred_region
      %s141 = ssub.s32 %s10, 1
      // Predicated region
      $region13: #{tpu_custom_call.1} parent=11 // pred_check
        %p142 = pneg %p43
      $region14: #{tpu_custom_call.1} parent=11 // pred_check_branch
        %144 = sbr.rel (%p142) target = $region16
      $region15: #{tpu_custom_call.1} parent=11 // pred_region
        _
      $region16: #{tpu_custom_call.1} parent=11 // pred_fallthru
        _
    $region12: #{tpu_custom_call.1} parent=5 // pred_fallthru
      _
    %p145 = scmp.lt.s32.totalorder %s10, 2
    // Predicated region
    $region17: #{tpu_custom_call.1} parent=5 // pred_check
      %p146 = pneg %p145
    $region18: #{tpu_custom_call.1} parent=5 // pred_check_branch
      %148 = sbr.rel (%p146) target = $region20
    $region19: #{tpu_custom_call.1} parent=5 // pred_region
      // Predicated region
      $region21: #{tpu_custom_call.1} parent=19 // pred_check
        %p149 = pneg %p65
      $region22: #{tpu_custom_call.1} parent=19 // pred_check_branch
        %151 = sbr.rel (%p149) target = $region24
      $region23: #{tpu_custom_call.1} parent=19 // pred_region
        %s152 = smul.u32 2, %s18
        %p153 = scmp.lt.s32.totalorder %s17, 1
        %s154 = scalar_select %p153, %s17, 1
        %p155 = scmp.lt.s32.totalorder %s152, 1
        %s156 = scalar_select %p155, %s152, 1
        %s157 = smul.addr %s154, 10
        %s158 = sadd.s32 %s156, %s157
        %s159 = smul.addr %s158, 4
        %s160 = scalar_lea.vmem %s1, %s159
        %s161 = smul.u32 2, %s18
      $region24: #{tpu_custom_call.1} parent=19 // pred_fallthru
        _
    $region20: #{tpu_custom_call.1} parent=5 // pred_fallthru
      _
    %p162 = scmp.le.s32.totalorder 1, %s10
    %p163 = scmp.lt.s32.totalorder %s10, 3
    %p164 = pnand %p162, %p163
    %p165 = pneg %p164
    // Predicated region
    $region25: #{tpu_custom_call.1} parent=5 // pred_check
      _
    $region26: #{tpu_custom_call.1} parent=5 // pred_check_branch
      %167 = sbr.rel (%p164) target = $region28
    $region27: #{tpu_custom_call.1} parent=5 // pred_region
      %s168 = ssub.s32 %s10, 1
      %p169 = pneg %p43
      %p170 = pneg %p40
      %s171 = smul.u32 2, %s20
      %p172 = scmp.lt.s32.totalorder %s19, 1
      %s173 = scalar_select %p172, %s19, 1
      %p174 = scmp.lt.s32.totalorder %s171, 1
      %s175 = scalar_select %p174, %s171, 1
      %s176 = smul.addr %s173, 10
      %s177 = sadd.s32 %s175, %s176
      %s178 = smul.addr %s177, 4
      %s179 = scalar_lea.vmem %s1, %s178
      %p180 = pneg %p71
      %p181 = pneg %p68
      %p182 = pneg %p99
      %p183 = pneg %p96
      %p184 = scmp.lt.s32.totalorder %s19, 1
      %s185 = scalar_select %p184, %s19, 1
      %p186 = scmp.lt.s32.totalorder %s20, 0
      %s187 = scalar_select %p186, %s20, 0
      %s188 = smul.addr %s187, 16
      %s189 = smul.addr %s185, 16
      %s190 = sadd.s32 %s188, %s189
      %s191 = smul.addr %s190, 8
      %s192 = scalar_lea.vmem %s2, %s191
      %p193 = pneg %p127
      %p194 = pneg %p124
      %p195 = scmp.lt.s32.totalorder %s19, 1
      %s196 = scalar_select %p195, %s19, 1
      %p197 = scmp.lt.s32.totalorder %s20, 0
      %s198 = scalar_select %p197, %s20, 0
      %s199 = smul.addr %s198, 16
      %s200 = smul.addr %s196, 16
      %s201 = sadd.s32 %s199, %s200
      %s202 = smul.addr %s201, 8
      %s203 = scalar_lea.vmem %s3, %s202
      %s204 = smul.u32 2, %s20
      %p205 = scmp.lt.s32.totalorder %s19, 1
      %s206 = scalar_select %p205, %s19, 1
      %p207 = scmp.lt.s32.totalorder %s204, 1
      %s208 = scalar_select %p207, %s204, 1
      %s209 = smul.addr %s206, 10
      %s210 = sadd.s32 %s208, %s209
      %s211 = smul.addr %s210, 4
      %s212 = scalar_lea.vmem %s1, %s211
      %s213 = smul.u32 2, %s20
      %p214 = scmp.lt.s32.totalorder %s19, 1
      %s215 = scalar_select %p214, %s19, 1
      %p216 = scmp.lt.s32.totalorder %s20, 0
      %s217 = scalar_select %p216, %s20, 0
      %s218 = smul.addr %s217, 16
      %s219 = smul.addr %s215, 16
      %s220 = sadd.s32 %s218, %s219
      %s221 = smul.addr %s220, 8
      %s222 = scalar_lea.vmem %s2, %s221
      %p223 = scmp.lt.s32.totalorder %s19, 1
      %s224 = scalar_select %p223, %s19, 1
      %p225 = scmp.lt.s32.totalorder %s20, 0
      %s226 = scalar_select %p225, %s20, 0
      %s227 = smul.addr %s226, 16
      %s228 = smul.addr %s224, 16
      %s229 = sadd.s32 %s227, %s228
      %s230 = smul.addr %s229, 8
      %s231 = scalar_lea.vmem %s3, %s230
      %v233 = vld [vmem:[%s212] sm:$0xff]
      %v234 = vld [vmem:[%s212 + $0x8] sm:$0xff]
      %v235 = vld [vmem:[%s212 + $0x10] sm:$0xff]
      %v236 = vld [vmem:[%s212 + $0x18] sm:$0xff]
      %v237 = vld [vmem:[%s212 + $0x20] sm:$0x33]
      %v238 = vld [vmem:[%s0] sm:$0xf]
      %v239 = vld [vmem:[%s0 + $0x4] sm:$0xf]
      %v240 = vld [vmem:[%s0 + $0x8] sm:$0xf]
      %v241 = vld [vmem:[%s0 + $0xc] sm:$0xf]
      %v242 = vld [vmem:[%s0 + $0x10] sm:$0xf]
      %v243 = vld [vmem:[%s0 + $0x14] sm:$0xf]
      %v244 = vld [vmem:[%s0 + $0x18] sm:$0xf]
      %v245 = vld [vmem:[%s0 + $0x1c] sm:$0xf]
      %v246 = vld [vmem:[%s0 + $0x20] sm:$0xf]
      %v247 = vld [vmem:[%s0 + $0x24] sm:$0xf]
      %v248 = vld [vmem:[%s0 + $0x28] sm:$0xf]
      %v249 = vld [vmem:[%s0 + $0x2c] sm:$0xf]
      %v250 = vld [vmem:[%s0 + $0x30] sm:$0xf]
      %v251 = vld [vmem:[%s0 + $0x34] sm:$0xf]
      %v252 = vld [vmem:[%s0 + $0x38] sm:$0xf]
      %v253 = vld [vmem:[%s0 + $0x3c] sm:$0xf]
      %v270 = vunpack.c.l.b16 %v238
      %v271 = vunpack.c.l.b16 %v239
      %v272 = vunpack.c.l.b16 %v240
      %v273 = vunpack.c.l.b16 %v241
      %v274 = vunpack.c.l.b16 %v242
      %v275 = vunpack.c.l.b16 %v243
      %v276 = vunpack.c.l.b16 %v244
      %v277 = vunpack.c.l.b16 %v245
      %v278 = vunpack.c.l.b16 %v246
      %v279 = vunpack.c.l.b16 %v247
      %v280 = vunpack.c.l.b16 %v248
      %v281 = vunpack.c.l.b16 %v249
      %v282 = vunpack.c.l.b16 %v250
      %v283 = vunpack.c.l.b16 %v251
      %v284 = vunpack.c.l.b16 %v252
      %v285 = vunpack.c.l.b16 %v253
      %v286 = vpack.c.b16 %v271, %v270
      %v287 = vpack.c.b16 %v273, %v272
      %v288 = vpack.c.b16 %v275, %v274
      %v289 = vpack.c.b16 %v277, %v276
      %v290 = vpack.c.b16 %v279, %v278
      %v291 = vpack.c.b16 %v281, %v280
      %v292 = vpack.c.b16 %v283, %v282
      %v293 = vpack.c.b16 %v285, %v284
      %v299 = vunpack.c.l.b16 %v233
      %v300 = vunpack.c.h.b16 %v233
      %v301 = vunpack.c.l.b16 %v234
      %v302 = vunpack.c.h.b16 %v234
      %v303 = vunpack.c.l.b16 %v235
      %v304 = vunpack.c.h.b16 %v235
      %v305 = vunpack.c.l.b16 %v236
      %v306 = vunpack.c.h.b16 %v236
      %v307 = vunpack.c.l.b16 %v237
      %v308 = vunpack.c.h.b16 %v237
      %v309 = vpack.c.b16 %v301, %v299
      %v310 = vpack.c.b16 %v302, %v300
      %v311 = vpack.c.b16 %v305, %v303
      %v312 = vpack.c.b16 %v306, %v304
      %v313 = vpack.c.b16 %v307, %v307
      %v314 = vpack.c.b16 %v308, %v308
      %vm319 = vcmask 293888
      %v321 = vsel %vm319, %v286, 0
      %v324 = vsel %vm319, %v287, 0
      %v327 = vsel %vm319, %v288, 0
      %v330 = vsel %vm319, %v289, 0
      %v333 = vsel %vm319, %v290, 0
      %v336 = vsel %vm319, %v291, 0
      %v339 = vsel %vm319, %v292, 0
      %v342 = vsel %vm319, %v293, 0
      %vm344 = vcmask 1041408
      %v346 = vsel %vm344, %v313, 0
      %v349 = vsel %vm344, %v314, 0
      %351 = vmatprep.subr.bf16.mxu0 %v310
      %352 = vmatpush1.bf16.msra.mxu0 %v309
      %353 = vmatprep.subr.bf16.mxu0 %v312
      %354 = vmatpush1.bf16.msra.mxu0 %v311
      %355 = vmatprep.subr.bf16.mxu0 %v349
      %356 = vmatpush1.bf16.msra.mxu0 %v346
      %357 = vmatprep.subr.bf16.mxu0 0
      %358 = vmatpush1.bf16.msra.mxu0 0
      %359 = vmatprep.subr.bf16.mxu0 0
      %360 = vmatpush1.bf16.msra.mxu0 0
      %361 = vmatprep.subr.bf16.mxu0 0
      %362 = vmatpush1.bf16.msra.mxu0 0
      %363 = vmatprep.subr.bf16.mxu0 0
      %364 = vmatpush1.bf16.msra.mxu0 0
      %365 = vmatprep.subr.bf16.mxu0 0
      %366 = vmatpush1.bf16.msra.mxu0 0
      %367 = vmatprep.subr.bf16.mxu0 0
      %368 = vmatpush1.bf16.msra.mxu0 0
      %369 = vmatprep.subr.bf16.mxu0 0
      %370 = vmatpush1.bf16.msra.mxu0 0
      %371 = vmatprep.subr.bf16.mxu0 0
      %372 = vmatpush1.bf16.msra.mxu0 0
      %373 = vmatprep.subr.bf16.mxu0 0
      %374 = vmatpush1.bf16.msra.mxu0 0
      %375 = vmatprep.subr.bf16.mxu0 0
      %376 = vmatpush1.bf16.msra.mxu0 0
      %377 = vmatprep.subr.bf16.mxu0 0
      %378 = vmatpush1.bf16.msra.mxu0 0
      %379 = vmatprep.subr.bf16.mxu0 0
      %380 = vmatpush1.bf16.msra.mxu0 0
      %381 = vmatprep.subr.bf16.mxu0 0
      %382 = vmatpush1.bf16.msra.mxu0 0
      %383 = vmatprep.mubr.bf16.mxu0 0
      %384 = vmatmul.mubr.bf16.gmra.mrb[0].mxu0 %v321
      %v385 = vpop.f32.mrb[0].mxu0
      %v386 = vadd.f32 0.0, %v385
      %v387 = vpop.f32.mrb[0].mxu0
      %v388 = vadd.f32 0.0, %v387
      %v389 = vpop.f32.mrb[0].mxu0
      %v390 = vadd.f32 0.0, %v389
      %v391 = vpop.f32.mrb[0].mxu0
      %v392 = vadd.f32 0.0, %v391
      %393 = vmatprep.mubr.bf16.mxu0 0
      %394 = vmatmul.mubr.bf16.gmra.mrb[0].mxu0 %v324
      %v395 = vpop.f32.mrb[0].mxu0
      %v396 = vadd.f32 0.0, %v395
      %v397 = vpop.f32.mrb[0].mxu0
      %v398 = vadd.f32 0.0, %v397
      %v399 = vpop.f32.mrb[0].mxu0
      %v400 = vadd.f32 0.0, %v399
      %v401 = vpop.f32.mrb[0].mxu0
      %v402 = vadd.f32 0.0, %v401
      %403 = vmatprep.mubr.bf16.mxu0 0
      %404 = vmatmul.mubr.bf16.gmra.mrb[0].mxu0 %v327
      %v405 = vpop.f32.mrb[0].mxu0
      %v406 = vadd.f32 0.0, %v405
      %v407 = vpop.f32.mrb[0].mxu0
      %v408 = vadd.f32 0.0, %v407
      %v409 = vpop.f32.mrb[0].mxu0
      %v410 = vadd.f32 0.0, %v409
      %v411 = vpop.f32.mrb[0].mxu0
      %v412 = vadd.f32 0.0, %v411
      %413 = vmatprep.mubr.bf16.mxu0 0
      %414 = vmatmul.mubr.bf16.gmra.mrb[0].mxu0 %v330
      %v415 = vpop.f32.mrb[0].mxu0
      %v416 = vadd.f32 0.0, %v415
      %v417 = vpop.f32.mrb[0].mxu0
      %v418 = vadd.f32 0.0, %v417
      %v419 = vpop.f32.mrb[0].mxu0
      %v420 = vadd.f32 0.0, %v419
      %v421 = vpop.f32.mrb[0].mxu0
      %v422 = vadd.f32 0.0, %v421
      %423 = vmatprep.mubr.bf16.mxu0 0
      %424 = vmatmul.mubr.bf16.gmra.mrb[0].mxu0 %v333
      %v425 = vpop.f32.mrb[0].mxu0
      %v426 = vadd.f32 0.0, %v425
      %v427 = vpop.f32.mrb[0].mxu0
      %v428 = vadd.f32 0.0, %v427
      %v429 = vpop.f32.mrb[0].mxu0
      %v430 = vadd.f32 0.0, %v429
      %v431 = vpop.f32.mrb[0].mxu0
      %v432 = vadd.f32 0.0, %v431
      %433 = vmatprep.mubr.bf16.mxu0 0
      %434 = vmatmul.mubr.bf16.gmra.mrb[0].mxu0 %v336
      %v435 = vpop.f32.mrb[0].mxu0
      %v436 = vadd.f32 0.0, %v435
      %v437 = vpop.f32.mrb[0].mxu0
      %v438 = vadd.f32 0.0, %v437
      %v439 = vpop.f32.mrb[0].mxu0
      %v440 = vadd.f32 0.0, %v439
      %v441 = vpop.f32.mrb[0].mxu0
      %v442 = vadd.f32 0.0, %v441
      %443 = vmatprep.mubr.bf16.mxu0 0
      %444 = vmatmul.mubr.bf16.gmra.mrb[0].mxu0 %v339
      %v445 = vpop.f32.mrb[0].mxu0
      %v446 = vadd.f32 0.0, %v445
      %v447 = vpop.f32.mrb[0].mxu0
      %v448 = vadd.f32 0.0, %v447
      %v449 = vpop.f32.mrb[0].mxu0
      %v450 = vadd.f32 0.0, %v449
      %v451 = vpop.f32.mrb[0].mxu0
      %v452 = vadd.f32 0.0, %v451
      %453 = vmatprep.mubr.bf16.mxu0 0
      %454 = vmatmul.mubr.bf16.gmra.mrb[0].mxu0 %v342
      %v455 = vpop.f32.mrb[0].mxu0
      %v456 = vadd.f32 0.0, %v455
      %v457 = vpop.f32.mrb[0].mxu0
      %v458 = vadd.f32 0.0, %v457
      %v459 = vpop.f32.mrb[0].mxu0
      %v460 = vadd.f32 0.0, %v459
      %v461 = vpop.f32.mrb[0].mxu0
      %v462 = vadd.f32 0.0, %v461
      %463 = vdwg.mxu0
      %v464 = vlaneseq
      %v465 = vand.u32 %v464, 127
      %v466 = vadd.s32 %v465, 128
      %s467 = smul.u32 %s20, 256
      %v468 = vstv %s467
      %v469 = vadd.s32 %v465, %v468
      %v470 = vadd.s32 %v466, %v468
      %vm471 = vcmp.lt.s32.totalorder %v469, 256
      %vm472 = vcmp.lt.s32.totalorder %v470, 256
      %v473 = vsel %vm471, 1, 0
      %v474 = vsel %vm472, 1, 0
      %v475 = vcvt.s32.f32 %v473
      %v476 = vcvt.s32.f32 %v474
      %s477 = ssub.s32 256, %s467
      %p478 = scmp.lt.s32.totalorder %s477, 256
      %s479 = scalar_select %p478, %s477, 256
      %p480 = scmp.gt.s32.totalorder %s479, 1
      %s481 = scalar_select %p480, %s479, 1
      %s482 = scvt.s32.f32 %s481
      %v483 = vadd.f32 %v386, %v388
      %484 = vadd.xlane.f32.xlu0 %v483
      %v485 = vpop.xlane.xlu0 %484
      %v486 = vadd.f32 %v390, %v392
      %487 = vadd.xlane.f32.xlu0 %v486
      %v488 = vpop.xlane.xlu0 %487
      %v489 = vadd.f32 %v396, %v398
      %490 = vadd.xlane.f32.xlu0 %v489
      %v491 = vpop.xlane.xlu0 %490
      %v492 = vadd.f32 %v400, %v402
      %493 = vadd.xlane.f32.xlu0 %v492
      %v494 = vpop.xlane.xlu0 %493
      %v495 = vadd.f32 %v406, %v408
      %496 = vadd.xlane.f32.xlu0 %v495
      %v497 = vpop.xlane.xlu0 %496
      %v498 = vadd.f32 %v410, %v412
      %499 = vadd.xlane.f32.xlu0 %v498
      %v500 = vpop.xlane.xlu0 %499
      %v501 = vadd.f32 %v416, %v418
      %502 = vadd.xlane.f32.xlu0 %v501
      %v503 = vpop.xlane.xlu0 %502
      %v504 = vadd.f32 %v420, %v422
      %505 = vadd.xlane.f32.xlu0 %v504
      %v506 = vpop.xlane.xlu0 %505
      %v507 = vadd.f32 %v426, %v428
      %508 = vadd.xlane.f32.xlu0 %v507
      %v509 = vpop.xlane.xlu0 %508
      %v510 = vadd.f32 %v430, %v432
      %511 = vadd.xlane.f32.xlu0 %v510
      %v512 = vpop.xlane.xlu0 %511
      %v513 = vadd.f32 %v436, %v438
      %514 = vadd.xlane.f32.xlu0 %v513
      %v515 = vpop.xlane.xlu0 %514
      %v516 = vadd.f32 %v440, %v442
      %517 = vadd.xlane.f32.xlu0 %v516
      %v518 = vpop.xlane.xlu0 %517
      %v519 = vadd.f32 %v446, %v448
      %520 = vadd.xlane.f32.xlu0 %v519
      %v521 = vpop.xlane.xlu0 %520
      %v522 = vadd.f32 %v450, %v452
      %523 = vadd.xlane.f32.xlu0 %v522
      %v524 = vpop.xlane.xlu0 %523
      %v525 = vadd.f32 %v456, %v458
      %526 = vadd.xlane.f32.xlu0 %v525
      %v527 = vpop.xlane.xlu0 %526
      %v528 = vadd.f32 %v460, %v462
      %529 = vadd.xlane.f32.xlu0 %v528
      %v530 = vpop.xlane.xlu0 %529
      %v531 = vstv %s482
      %v532 = vrcp.pop %v531
      %v533 = vmul.f32 %v485, %v532
      %v534 = vmul.f32 %v488, %v532
      %v535 = vmul.f32 %v491, %v532
      %v536 = vmul.f32 %v494, %v532
      %v537 = vmul.f32 %v497, %v532
      %v538 = vmul.f32 %v500, %v532
      %v539 = vmul.f32 %v503, %v532
      %v540 = vmul.f32 %v506, %v532
      %v541 = vmul.f32 %v509, %v532
      %v542 = vmul.f32 %v512, %v532
      %v543 = vmul.f32 %v515, %v532
      %v544 = vmul.f32 %v518, %v532
      %v545 = vmul.f32 %v521, %v532
      %v546 = vmul.f32 %v524, %v532
      %v547 = vmul.f32 %v527, %v532
      %v548 = vmul.f32 %v530, %v532
      %v549 = vsub.f32 %v386, %v533
      %v550 = vsub.f32 %v388, %v533
      %v551 = vsub.f32 %v390, %v534
      %v552 = vsub.f32 %v392, %v534
      %v553 = vsub.f32 %v396, %v535
      %v554 = vsub.f32 %v398, %v535
      %v555 = vsub.f32 %v400, %v536
      %v556 = vsub.f32 %v402, %v536
      %v557 = vsub.f32 %v406, %v537
      %v558 = vsub.f32 %v408, %v537
      %v559 = vsub.f32 %v410, %v538
      %v560 = vsub.f32 %v412, %v538
      %v561 = vsub.f32 %v416, %v539
      %v562 = vsub.f32 %v418, %v539
      %v563 = vsub.f32 %v420, %v540
      %v564 = vsub.f32 %v422, %v540
      %v565 = vsub.f32 %v426, %v541
      %v566 = vsub.f32 %v428, %v541
      %v567 = vsub.f32 %v430, %v542
      %v568 = vsub.f32 %v432, %v542
      %v569 = vsub.f32 %v436, %v543
      %v570 = vsub.f32 %v438, %v543
      %v571 = vsub.f32 %v440, %v544
      %v572 = vsub.f32 %v442, %v544
      %v573 = vsub.f32 %v446, %v545
      %v574 = vsub.f32 %v448, %v545
      %v575 = vsub.f32 %v450, %v546
      %v576 = vsub.f32 %v452, %v546
      %v577 = vsub.f32 %v456, %v547
      %v578 = vsub.f32 %v458, %v547
      %v579 = vsub.f32 %v460, %v548
      %v580 = vsub.f32 %v462, %v548
      %v581 = vmul.f32 %v549, %v475
      %v582 = vmul.f32 %v550, %v476
      %v583 = vmul.f32 %v551, %v475
      %v584 = vmul.f32 %v552, %v476
      %v585 = vmul.f32 %v553, %v475
      %v586 = vmul.f32 %v554, %v476
      %v587 = vmul.f32 %v555, %v475
      %v588 = vmul.f32 %v556, %v476
      %v589 = vmul.f32 %v557, %v475
      %v590 = vmul.f32 %v558, %v476
      %v591 = vmul.f32 %v559, %v475
      %v592 = vmul.f32 %v560, %v476
      %v593 = vmul.f32 %v561, %v475
      %v594 = vmul.f32 %v562, %v476
      %v595 = vmul.f32 %v563, %v475
      %v596 = vmul.f32 %v564, %v476
      %v597 = vmul.f32 %v565, %v475
      %v598 = vmul.f32 %v566, %v476
      %v599 = vmul.f32 %v567, %v475
      %v600 = vmul.f32 %v568, %v476
      %v601 = vmul.f32 %v569, %v475
      %v602 = vmul.f32 %v570, %v476
      %v603 = vmul.f32 %v571, %v475
      %v604 = vmul.f32 %v572, %v476
      %v605 = vmul.f32 %v573, %v475
      %v606 = vmul.f32 %v574, %v476
      %v607 = vmul.f32 %v575, %v475
      %v608 = vmul.f32 %v576, %v476
      %v609 = vmul.f32 %v577, %v475
      %v610 = vmul.f32 %v578, %v476
      %v611 = vmul.f32 %v579, %v475
      %v612 = vmul.f32 %v580, %v476
      %v613 = vmul.f32 %v581, %v581
      %v614 = vmul.f32 %v582, %v582
      %v615 = vmul.f32 %v583, %v583
      %v616 = vmul.f32 %v584, %v584
      %v617 = vmul.f32 %v585, %v585
      %v618 = vmul.f32 %v586, %v586
      %v619 = vmul.f32 %v587, %v587
      %v620 = vmul.f32 %v588, %v588
      %v621 = vmul.f32 %v589, %v589
      %v622 = vmul.f32 %v590, %v590
      %v623 = vmul.f32 %v591, %v591
      %v624 = vmul.f32 %v592, %v592
      %v625 = vmul.f32 %v593, %v593
      %v626 = vmul.f32 %v594, %v594
      %v627 = vmul.f32 %v595, %v595
      %v628 = vmul.f32 %v596, %v596
      %v629 = vmul.f32 %v597, %v597
      %v630 = vmul.f32 %v598, %v598
      %v631 = vmul.f32 %v599, %v599
      %v632 = vmul.f32 %v600, %v600
      %v633 = vmul.f32 %v601, %v601
      %v634 = vmul.f32 %v602, %v602
      %v635 = vmul.f32 %v603, %v603
      %v636 = vmul.f32 %v604, %v604
      %v637 = vmul.f32 %v605, %v605
      %v638 = vmul.f32 %v606, %v606
      %v639 = vmul.f32 %v607, %v607
      %v640 = vmul.f32 %v608, %v608
      %v641 = vmul.f32 %v609, %v609
      %v642 = vmul.f32 %v610, %v610
      %v643 = vmul.f32 %v611, %v611
      %v644 = vmul.f32 %v612, %v612
      %v645 = vadd.f32 %v613, %v614
      %646 = vadd.xlane.f32.xlu0 %v645
      %v647 = vpop.xlane.xlu0 %646
      %v648 = vadd.f32 %v615, %v616
      %649 = vadd.xlane.f32.xlu0 %v648
      %v650 = vpop.xlane.xlu0 %649
      %v651 = vadd.f32 %v617, %v618
      %652 = vadd.xlane.f32.xlu0 %v651
      %v653 = vpop.xlane.xlu0 %652
      %v654 = vadd.f32 %v619, %v620
      %655 = vadd.xlane.f32.xlu0 %v654
      %v656 = vpop.xlane.xlu0 %655
      %v657 = vadd.f32 %v621, %v622
      %658 = vadd.xlane.f32.xlu0 %v657
      %v659 = vpop.xlane.xlu0 %658
      %v660 = vadd.f32 %v623, %v624
      %661 = vadd.xlane.f32.xlu0 %v660
      %v662 = vpop.xlane.xlu0 %661
      %v663 = vadd.f32 %v625, %v626
      %664 = vadd.xlane.f32.xlu0 %v663
      %v665 = vpop.xlane.xlu0 %664
      %v666 = vadd.f32 %v627, %v628
      %667 = vadd.xlane.f32.xlu0 %v666
      %v668 = vpop.xlane.xlu0 %667
      %v669 = vadd.f32 %v629, %v630
      %670 = vadd.xlane.f32.xlu0 %v669
      %v671 = vpop.xlane.xlu0 %670
      %v672 = vadd.f32 %v631, %v632
      %673 = vadd.xlane.f32.xlu0 %v672
      %v674 = vpop.xlane.xlu0 %673
      %v675 = vadd.f32 %v633, %v634
      %676 = vadd.xlane.f32.xlu0 %v675
      %v677 = vpop.xlane.xlu0 %676
      %v678 = vadd.f32 %v635, %v636
      %679 = vadd.xlane.f32.xlu0 %v678
      %v680 = vpop.xlane.xlu0 %679
      %v681 = vadd.f32 %v637, %v638
      %682 = vadd.xlane.f32.xlu0 %v681
      %v683 = vpop.xlane.xlu0 %682
      %v684 = vadd.f32 %v639, %v640
      %685 = vadd.xlane.f32.xlu0 %v684
      %v686 = vpop.xlane.xlu0 %685
      %v687 = vadd.f32 %v641, %v642
      %688 = vadd.xlane.f32.xlu0 %v687
      %v689 = vpop.xlane.xlu0 %688
      %v690 = vadd.f32 %v643, %v644
      %691 = vadd.xlane.f32.xlu0 %v690
      %v692 = vpop.xlane.xlu0 %691
      %vm693 = vcmask 7168
      %694 = vst.msk [vmem:[%s222] sm:$0xff] %vm693, %v485
      %695 = vst.msk [vmem:[%s222 + $0x8] sm:$0xff] %vm693, %v488
      %696 = vst.msk [vmem:[%s222 + $0x10] sm:$0xff] %vm693, %v491
      %697 = vst.msk [vmem:[%s222 + $0x18] sm:$0xff] %vm693, %v494
      %698 = vst.msk [vmem:[%s222 + $0x20] sm:$0xff] %vm693, %v497
      %699 = vst.msk [vmem:[%s222 + $0x28] sm:$0xff] %vm693, %v500
      %700 = vst.msk [vmem:[%s222 + $0x30] sm:$0xff] %vm693, %v503
      %701 = vst.msk [vmem:[%s222 + $0x38] sm:$0xff] %vm693, %v506
      %702 = vst.msk [vmem:[%s222 + $0x40] sm:$0xff] %vm693, %v509
      %703 = vst.msk [vmem:[%s222 + $0x48] sm:$0xff] %vm693, %v512
      %704 = vst.msk [vmem:[%s222 + $0x50] sm:$0xff] %vm693, %v515
      %705 = vst.msk [vmem:[%s222 + $0x58] sm:$0xff] %vm693, %v518
      %706 = vst.msk [vmem:[%s222 + $0x60] sm:$0xff] %vm693, %v521
      %707 = vst.msk [vmem:[%s222 + $0x68] sm:$0xff] %vm693, %v524
      %708 = vst.msk [vmem:[%s222 + $0x70] sm:$0xff] %vm693, %v527
      %709 = vst.msk [vmem:[%s222 + $0x78] sm:$0xff] %vm693, %v530
      %710 = vst.msk [vmem:[%s231] sm:$0xff] %vm693, %v647
      %711 = vst.msk [vmem:[%s231 + $0x8] sm:$0xff] %vm693, %v650
      %712 = vst.msk [vmem:[%s231 + $0x10] sm:$0xff] %vm693, %v653
      %713 = vst.msk [vmem:[%s231 + $0x18] sm:$0xff] %vm693, %v656
      %714 = vst.msk [vmem:[%s231 + $0x20] sm:$0xff] %vm693, %v659
      %715 = vst.msk [vmem:[%s231 + $0x28] sm:$0xff] %vm693, %v662
      %716 = vst.msk [vmem:[%s231 + $0x30] sm:$0xff] %vm693, %v665
      %717 = vst.msk [vmem:[%s231 + $0x38] sm:$0xff] %vm693, %v668
      %718 = vst.msk [vmem:[%s231 + $0x40] sm:$0xff] %vm693, %v671
      %719 = vst.msk [vmem:[%s231 + $0x48] sm:$0xff] %vm693, %v674
      %720 = vst.msk [vmem:[%s231 + $0x50] sm:$0xff] %vm693, %v677
      %721 = vst.msk [vmem:[%s231 + $0x58] sm:$0xff] %vm693, %v680
      %722 = vst.msk [vmem:[%s231 + $0x60] sm:$0xff] %vm693, %v683
      %723 = vst.msk [vmem:[%s231 + $0x68] sm:$0xff] %vm693, %v686
      %724 = vst.msk [vmem:[%s231 + $0x70] sm:$0xff] %vm693, %v689
      %725 = vst.msk [vmem:[%s231 + $0x78] sm:$0xff] %vm693, %v692
      %p726 = scmp.lt.s32.totalorder %s19, 1
      %s727 = scalar_select %p726, %s19, 1
      %p728 = scmp.lt.s32.totalorder %s20, 0
      %s729 = scalar_select %p728, %s20, 0
      %s730 = smul.addr %s729, 16
      %s731 = smul.addr %s727, 16
      %s732 = sadd.s32 %s730, %s731
      %s733 = smul.addr %s732, 8
      %s734 = scalar_lea.vmem %s2, %s733
      %p735 = scmp.lt.s32.totalorder %s19, 1
      %s736 = scalar_select %p735, %s19, 1
      %p737 = scmp.lt.s32.totalorder %s20, 0
      %s738 = scalar_select %p737, %s20, 0
      %s739 = smul.addr %s738, 16
      %s740 = smul.addr %s736, 16
      %s741 = sadd.s32 %s739, %s740
      %s742 = smul.addr %s741, 8
      %s743 = scalar_lea.vmem %s3, %s742
      // Predicated region
      $region29: #{tpu_custom_call.1} parent=27 // pred_check
        %p744 = pneg %p96
      $region30: #{tpu_custom_call.1} parent=27 // pred_check_branch
        %746 = sbr.rel (%p744) target = $region32
      $region31: #{tpu_custom_call.1} parent=27 // pred_region
        _
      $region32: #{tpu_custom_call.1} parent=27 // pred_fallthru
        _
      // Predicated region
      $region33: #{tpu_custom_call.1} parent=27 // pred_check
        %p747 = pneg %p124
      $region34: #{tpu_custom_call.1} parent=27 // pred_check_branch
        %749 = sbr.rel (%p747) target = $region36
      $region35: #{tpu_custom_call.1} parent=27 // pred_region
        _
      $region36: #{tpu_custom_call.1} parent=27 // pred_fallthru
        _
    $region28: #{tpu_custom_call.1} parent=5 // pred_fallthru
      _
    %p750 = scmp.le.s32.totalorder 2, %s10
    // Predicated region
    $region37: #{tpu_custom_call.1} parent=5 // pred_check
      %p751 = pneg %p750
    $region38: #{tpu_custom_call.1} parent=5 // pred_check_branch
      %753 = sbr.rel (%p751) target = $region40
    $region39: #{tpu_custom_call.1} parent=5 // pred_region
      %s754 = ssub.s32 %s10, 2
      // Predicated region
      $region41: #{tpu_custom_call.1} parent=39 // pred_check
        %p755 = pneg %p102
      $region42: #{tpu_custom_call.1} parent=39 // pred_check_branch
        %757 = sbr.rel (%p755) target = $region44
      $region43: #{tpu_custom_call.1} parent=39 // pred_region
        %p758 = scmp.lt.s32.totalorder %s21, 1
        %s759 = scalar_select %p758, %s21, 1
        %p760 = scmp.lt.s32.totalorder %s22, 0
        %s761 = scalar_select %p760, %s22, 0
        %s762 = smul.addr %s761, 16
        %s763 = smul.addr %s759, 16
        %s764 = sadd.s32 %s762, %s763
        %s765 = smul.addr %s764, 8
        %s766 = scalar_lea.vmem %s2, %s765
      $region44: #{tpu_custom_call.1} parent=39 // pred_fallthru
        _
      // Predicated region
      $region45: #{tpu_custom_call.1} parent=39 // pred_check
        %p767 = pneg %p130
      $region46: #{tpu_custom_call.1} parent=39 // pred_check_branch
        %769 = sbr.rel (%p767) target = $region48
      $region47: #{tpu_custom_call.1} parent=39 // pred_region
        %p770 = scmp.lt.s32.totalorder %s21, 1
        %s771 = scalar_select %p770, %s21, 1
        %p772 = scmp.lt.s32.totalorder %s22, 0
        %s773 = scalar_select %p772, %s22, 0
        %s774 = smul.addr %s773, 16
        %s775 = smul.addr %s771, 16
        %s776 = sadd.s32 %s774, %s775
        %s777 = smul.addr %s776, 8
        %s778 = scalar_lea.vmem %s3, %s777
      $region48: #{tpu_custom_call.1} parent=39 // pred_fallthru
        _
    $region40: #{tpu_custom_call.1} parent=5 // pred_fallthru
      _
  $region6: #{tpu_custom_call.1} parent=0 // loop_footer
    %s14 = sadd.s32 1, %s10
  $region7: #{tpu_custom_call.1} parent=0 // loop_footer_branch
    %9 = sbr.rel target = $region3
  $region8: #{tpu_custom_call.1} parent=0 // loop_exit
    _

</llo_original>
